<compile_context>
chip_gen: v7x
topology: tpu7x:2x2x1
jax: 0.10.0
libtpu: 0.0.40
codegen_flags: <defaults>
</compile_context>

<pallas_src>
import jax
import jax.numpy as jnp
import numpy as np
from jax.experimental import pallas as pl
from jax.experimental.pallas import tpu as pltpu

FEAT_PAD = 128  # lane-dense padded feature width for every layer (real dims <= 32)


# ---------------------------------------------------------------------------
# Kernels
# ---------------------------------------------------------------------------
def relwise_hw_kernel(h_ref, w_ref, o_ref):
    """HW_r tile: (tile_m, 128) bf16 @ (128, 128) bf16 -> f32 acc -> bf16 store."""
    o_ref[...] = jnp.dot(h_ref[...], w_ref[...],
                         preferred_element_type=jnp.float32).astype(o_ref.dtype)


def agg_relu_kernel(a_ref, hw_ref, o_ref, acc_ref):
    """Fused-relation aggregate: one K-tiled matmul with VMEM f32 accumulator.

    a_ref:   (tile_r, tile_k)   bf16  rows of A_fused for this node tile / K slice
    hw_ref:  (tile_k, FEAT_PAD) bf16  matching slice of stacked HW_r
    o_ref:   (tile_r, FEAT_PAD)       ReLU(sum) written on the last K step
    acc_ref: (tile_r, FEAT_PAD) f32   VMEM accumulator (persists across K steps)
    """
    @pl.when(pl.program_id(1) == 0)
    def _init():
        acc_ref[...] = jnp.zeros_like(acc_ref)

    acc_ref[...] += jnp.dot(a_ref[...], hw_ref[...],
                            preferred_element_type=jnp.float32)

    @pl.when(pl.program_id(1) == pl.num_programs(1) - 1)
    def _finalize():
        o_ref[...] = jnp.maximum(acc_ref[...], 0.0).astype(o_ref.dtype)


# ---------------------------------------------------------------------------
# Tiling / VMEM policy
# ---------------------------------------------------------------------------
def _vmem_capacity_bytes():
    try:
        return int(pltpu.get_tpu_info().vmem_capacity_bytes)
    except Exception:
        return 64 << 20  # conservative: v7x per-TensorCore VMEM


def _choose_tiles(n_pad, k_total, budget_bytes):
    """Pick (tile_r, tile_k) so the grid always has >=2 row steps (megacore) and,
    whenever possible, >=2 K steps (pipelining), within the VMEM budget."""
    row_cands = [t for t in (512, 256, 128, 64, 32, 16)
                 if t <= n_pad and n_pad % t == 0 and n_pad // t >= 2]
    if not row_cands:
        row_cands = [16]
    k_cands = [t for t in (2048, 1024, 512, 256, 128)
               if t <= k_total and k_total % t == 0 and k_total // t >= 2]
    if not k_cands:
        k_cands = [k_total]
    for tile_r in row_cands:          # prefer big row tiles (HBM roofline)
        for tile_k in k_cands:        # then big K tiles
            need = (2 * tile_r * tile_k * 2          # A block, double-buffered bf16
                    + 2 * tile_k * FEAT_PAD * 2      # HW block, double-buffered bf16
                    + 2 * tile_r * FEAT_PAD * 4      # out block (worst case f32)
                    + tile_r * FEAT_PAD * 4)         # f32 accumulator scratch
            if need <= budget_bytes:
                return tile_r, tile_k
    return row_cands[-1], k_cands[-1]


# ---------------------------------------------------------------------------
# pallas_call wrappers
# ---------------------------------------------------------------------------
def rgcn_relwise_hw(h_bf16, w_pad_bf16, tile_m, vmem_limit):
    """HW[r] = H @ W_r for every relation, tiled over (relation, node-rows)."""
    num_rels = w_pad_bf16.shape[0]
    n_pad = h_bf16.shape[0]
    return pl.pallas_call(
        relwise_hw_kernel,
        out_shape=jax.ShapeDtypeStruct((num_rels, n_pad, FEAT_PAD), jnp.bfloat16),
        grid=(num_rels, n_pad // tile_m),
        in_specs=[
            pl.BlockSpec((tile_m, FEAT_PAD), lambda r, i: (i, 0)),
            pl.BlockSpec((None, FEAT_PAD, FEAT_PAD), lambda r, i: (r, 0, 0)),
        ],
        out_specs=pl.BlockSpec((None, tile_m, FEAT_PAD), lambda r, i: (r, i, 0)),
        compiler_params=pltpu.CompilerParams(
            dimension_semantics=("parallel", "parallel"),
            vmem_limit_bytes=vmem_limit),
    )(h_bf16, w_pad_bf16)


def rgcn_aggregate(a_fused_bf16, hw_stack_bf16, out_dtype, tile_r, tile_k, vmem_limit):
    """ReLU( A_fused @ HW_stack ): row-tiled x K-tiled matmul, f32 VMEM accumulator."""
    n_pad, k_total = a_fused_bf16.shape
    return pl.pallas_call(
        agg_relu_kernel,
        out_shape=jax.ShapeDtypeStruct((n_pad, FEAT_PAD), out_dtype),
        grid=(n_pad // tile_r, k_total // tile_k),
        in_specs=[
            pl.BlockSpec((tile_r, tile_k), lambda i, k: (i, k)),
            pl.BlockSpec((tile_k, FEAT_PAD), lambda i, k: (k, 0)),
        ],
        out_specs=pl.BlockSpec((tile_r, FEAT_PAD), lambda i, k: (i, 0)),
        scratch_shapes=[pltpu.VMEM((tile_r, FEAT_PAD), jnp.float32)],
        compiler_params=pltpu.CompilerParams(
            dimension_semantics=("parallel", "arbitrary"),
            vmem_limit_bytes=vmem_limit),
    )(a_fused_bf16, hw_stack_bf16)


def rgcn_forward(a_rel, x, weights):
    """Stacked R-GCN forward: h <- ReLU( sum_r A_r @ h @ W_r ) per layer.

    a_rel:   (R, N, N) f32 per-relation 0/1 adjacency (fn.sum aggregation)
    x:       (N, in_feat) f32 node features
    weights: list of (R, in_feat_l, out_feat_l) f32 per-relation weights
    returns: (N, out_feat_last) f32
    """
    num_rels, n, _ = a_rel.shape
    out_dim = weights[-1].shape[-1]
    dims = [x.shape[1]] + [w.shape[2] for w in weights]
    assert all(d <= FEAT_PAD for d in dims), "feature dims must be <= FEAT_PAD"

    n_pad = int(pl.cdiv(n, 128)) * 128
    k_total = num_rels * n_pad

    vmem_limit = int(min(_vmem_capacity_bytes() // 2, 64 << 20))
    tile_r, tile_k = _choose_tiles(n_pad, k_total, vmem_limit // 2)

    # Fused relation-major adjacency (built once per graph, reused every layer):
    #   A_fused[v, r*n_pad + u] = A_r[v, u]     (0/1 is exact in bf16)
    a_pad = jnp.zeros((num_rels, n_pad, n_pad), jnp.bfloat16)
    a_pad = a_pad.at[:, :n, :n].set(a_rel.astype(jnp.bfloat16))
    a_fused = jnp.transpose(a_pad, (1, 0, 2)).reshape(n_pad, k_total)

    # Lane-dense padded features, already bf16 at the kernel boundary.
    h = jnp.zeros((n_pad, FEAT_PAD), jnp.bfloat16).at[:n, :x.shape[1]].set(
        x.astype(jnp.bfloat16))

    for li, w in enumerate(weights):
        w_pad = jnp.zeros((num_rels, FEAT_PAD, FEAT_PAD), jnp.bfloat16)
        w_pad = w_pad.at[:, :w.shape[1], :w.shape[2]].set(w.astype(jnp.bfloat16))

        hw = rgcn_relwise_hw(h, w_pad, tile_r, vmem_limit)       # (R, n_pad, 128) bf16
        hw_stack = hw.reshape(k_total, FEAT_PAD)                 # contiguous, free

        is_last = li == len(weights) - 1
        out_dtype = jnp.float32 if is_last else jnp.bfloat16     # inner layers stay bf16
        h = rgcn_aggregate(a_fused, hw_stack, out_dtype, tile_r, tile_k, vmem_limit)

    return h[:n, :out_dim]


# ---------------------------------------------------------------------------
# References
# ---------------------------------------------------------------------------
def reference_f32(a_rel, x, weights):
    hi = jax.lax.Precision.HIGHEST
    h = x
    for w in weights:
        agg = jnp.einsum('rvu,uf->rvf', a_rel, h, precision=hi)
        h = jnp.maximum(jnp.einsum('rvf,rfo->vo', agg, w, precision=hi), 0.0)
    return h


def reference_mirrored(a_rel, x, weights):
    """Mirrors the kernel pipeline's rounding: bf16 operands, f32 accumulation,
    bf16 HW store, bf16 inter-layer activations, f32 final layer."""
    hi = jax.lax.Precision.HIGHEST
    rd = lambda t: t.astype(jnp.bfloat16).astype(jnp.float32)
    a = rd(a_rel)
    h = rd(x)
    for li, w in enumerate(weights):
        hw = rd(jnp.einsum('uf,rfo->ruo', h, rd(w), precision=hi))   # HW precompute
        h = jnp.maximum(jnp.einsum('rvu,ruo->vo', a, hw, precision=hi), 0.0)
        if li != len(weights) - 1:
            h = rd(h)
    return h


def xavier_uniform(key, shape, gain=np.sqrt(2.0)):
    # shape = (num_bases, in_feat, out_feat), matching RGCNLayer.weight init.
    receptive = int(np.prod(shape[2:]))
    fan_in, fan_out = shape[1] * receptive, shape[0] * receptive
    bound = gain * np.sqrt(6.0 / (fan_in + fan_out))
    return jax.random.uniform(key, shape, jnp.float32, -bound, bound)


if __name__ == "__main__":
    N, in_dim, hidden_dim, out_dim = 256, 4, 32, 1
    num_rels = 2  # num_bases defaults to num_rels (no basis decomposition / w_comp)

    key = jax.random.PRNGKey(0)
    kx, k1, k2, k3 = jax.random.split(key, 4)

    x = jax.random.normal(kx, (N, in_dim), jnp.float32)
    w1 = xavier_uniform(k1, (num_rels, in_dim, hidden_dim))
    w2 = xavier_uniform(k2, (num_rels, hidden_dim, hidden_dim))
    w3 = xavier_uniform(k3, (num_rels, hidden_dim, out_dim))
    weights = [w1, w2, w3]

    # Deterministic relation-typed graph: relation 0 = ring edges u->u+1,
    # relation 1 = skip edges u->u+3 (every node has one in-edge per relation).
    A = np.zeros((num_rels, N, N), np.float32)
    for u in range(N):
        A[0, (u + 1) % N, u] += 1.0
        A[1, (u + 3) % N, u] += 1.0
    a_rel = jnp.asarray(A)

    out = jax.block_until_ready(rgcn_forward(a_rel, x, weights))

    # Tight check against a reference that mirrors the kernel's bf16 rounding.
    ref_tight = reference_mirrored(a_rel, x, weights)
    np.testing.assert_allclose(np.asarray(out), np.asarray(ref_tight),
                               rtol=5e-3, atol=5e-3)
    # Loose check against pure-f32 math (bf16 operand rounding is the only diff).
    ref_f32 = reference_f32(a_rel, x, weights)
    np.testing.assert_allclose(np.asarray(out), np.asarray(ref_f32),
                               rtol=5e-2, atol=5e-2)

    print("KERNEL_OK")
</pallas_src>

<mosaic_0001>
module attributes {stable_mosaic.version = 11 : i64} {
  func.func @relwise_hw_kernel(%arg0: i32, %arg1: i32, %arg2: memref<128x128xbf16, #tpu.memory_space<vmem>>, %arg3: memref<1x128x128xbf16, #tpu.memory_space<vmem>>, %arg4: memref<1x128x128xbf16, #tpu.memory_space<vmem>>) attributes {dimension_semantics = [#tpu.dimension_semantics<parallel>, #tpu.dimension_semantics<parallel>], iteration_bounds = array<i64: 2, 2>, scalar_prefetch = 0 : i64, scratch_operands = 0 : i64, tpu.core_type = #tpu.core_type<tc>, window_params = [{transform_indices = @transform_0, window_bounds = array<i64: 128, 128>}, {transform_indices = @transform_1, window_bounds = array<i64: 1, 128, 128>}, {transform_indices = @transform_2, window_bounds = array<i64: 1, 128, 128>}]} {
    %c0 = arith.constant 0 : index
    %c0_0 = arith.constant 0 : index
    %0 = vector.load %arg2[%c0, %c0_0] : memref<128x128xbf16, #tpu.memory_space<vmem>>, vector<128x128xbf16>
    %c0_1 = arith.constant 0 : index
    %c0_2 = arith.constant 0 : index
    %c0_3 = arith.constant 0 : index
    %1 = vector.load %arg3[%c0_1, %c0_2, %c0_3] : memref<1x128x128xbf16, #tpu.memory_space<vmem>>, vector<1x128x128xbf16>
    %2 = vector.shape_cast %1 : vector<1x128x128xbf16> to vector<128x128xbf16>
    %cst = arith.constant dense<0.000000e+00> : vector<128x128xf32>
    %3 = tpu.matmul %0, %2, %cst {dimension_numbers = #tpu.dot_dimension_numbers<[1], [0], [0], [1], [0, 0, 1, 1], [], []>} : vector<128x128xbf16>, vector<128x128xbf16>, vector<128x128xf32> -> vector<128x128xf32>
    %4 = arith.truncf %3 : vector<128x128xf32> to vector<128x128xbf16>
    %c0_4 = arith.constant 0 : index
    %c0_5 = arith.constant 0 : index
    %c0_6 = arith.constant 0 : index
    %5 = vector.load %arg4[%c0_4, %c0_5, %c0_6] : memref<1x128x128xbf16, #tpu.memory_space<vmem>>, vector<1x128x128xbf16>
    %6 = vector.shape_cast %5 : vector<1x128x128xbf16> to vector<128x128xbf16>
    %7 = vector.shape_cast %4 : vector<128x128xbf16> to vector<1x128x128xbf16>
    tpu.vector_store %arg4[%c0_4, %c0_5, %c0_6], %7 {strides = array<i32>} : memref<1x128x128xbf16, #tpu.memory_space<vmem>>, vector<1x128x128xbf16>,
    return
  }
  func.func @transform_0(%arg0: i32, %arg1: i32) -> (i32, i32) {
    %c0_i32 = arith.constant 0 : i32
    %c0_i32_0 = arith.constant 0 : i32
    return %arg1, %c0_i32 : i32, i32
  }
  func.func @transform_1(%arg0: i32, %arg1: i32) -> (i32, i32, i32) {
    %c0_i32 = arith.constant 0 : i32
    %c0_i32_0 = arith.constant 0 : i32
    %c0_i32_1 = arith.constant 0 : i32
    return %arg0, %c0_i32, %c0_i32_0 : i32, i32, i32
  }
  func.func @transform_2(%arg0: i32, %arg1: i32) -> (i32, i32, i32) {
    %c0_i32 = arith.constant 0 : i32
    %c0_i32_0 = arith.constant 0 : i32
    return %arg0, %arg1, %c0_i32 : i32, i32, i32
  }
}

</mosaic_0001>

<llo_original>
// kernel: tpu_custom_call.1
$region0: #{tpu_custom_call.1}
  #allocation0 [shape = 'u32[]', space=smem, size = 0x4, offset = 0x4, fixed_abs, tag = 'smem constant byte address 0x4 - core index']
  #allocation1 [shape = 'u32[144,128]{1,0:T(1,128)}', space=vmem, size = 0x12000, scoped, tag = 'internal scratch']
  %s0 = inlined_call_operand.hbm [shape: bf16[256,128], index: 0, kind: input, shape index: {}]
  %s1 = inlined_call_operand.hbm [shape: bf16[2,128,128], index: 1, kind: input, shape index: {}]
  %s2 = inlined_call_operand.hbm [shape: bf16[2,256,128], index: 2, kind: output, shape index: {}]
  %s3 = sld [smem:[#allocation0]]
  $region49: #{tpu_custom_call.1} parent=0
    _
  %s5 = ssub.s32 1, %s3
  %s6 = scalar_select 0, %s5, %s3
  $region1: #{tpu_custom_call.1} parent=0
    #allocation2 [shape = 'u8[65536]{0}', space=vmem, size = 0x10000, scoped, tag = 'input window, operand 0']
    #allocation3 [shape = 's32[2]{0}', space=sflag, size = 0x8, scoped, tag = 'scoped memory for tpu_custom_call.1']
    #allocation4 [shape = 's32[2]{0}', space=sflag, size = 0x8, scoped, tag = 'scoped memory for tpu_custom_call.1']
    #allocation5 [shape = 'u8[65536]{0}', space=vmem, size = 0x10000, scoped, tag = 'input window, operand 1']
    #allocation6 [shape = 's32[2]{0}', space=sflag, size = 0x8, scoped, tag = 'scoped memory for tpu_custom_call.1']
    #allocation7 [shape = 'u8[65536]{0}', space=vmem, size = 0x10000, scoped, tag = 'output window, operand 0']
    %7 = vsyncpa [#allocation3], 0
    %s8 = scalar_lea.sflag [#allocation3], 1
    %9 = vsyncpa %s8, 0
    %10 = vsyncpa [#allocation6], 0
    %s11 = scalar_lea.sflag [#allocation6], 1
    %12 = vsyncpa %s11, 0
    %13 = vsyncpa [#allocation4], 0
    %s14 = scalar_lea.sflag [#allocation4], 1
    %15 = vsyncpa %s14, 0
    loop: start=0, step=1, limit=6
    $region2: #{tpu_custom_call.1} parent=1 // loop_pre_header
      _
    $region3: #{tpu_custom_call.1} parent=1 // loop_header
      %s17 = sphi 0, %s21
      %p18 = scmp.ge.s32.totalorder %s17, 6
      %s24 = sphi 0, %s36
      %s25 = sphi 0, %s32
      %s26 = sphi 0, %s24
      %s27 = sphi 0, %s25
      %s28 = sphi 0, %s26
      %s29 = sphi 0, %s27
      %s39 = sphi 0, %s41
      %s42 = sphi 0, %s39
      %s43 = sphi 0, %s42
      %s59 = sphi 0, %s43
      %s65 = sphi 0, %s67
      %s68 = sphi 0, %s65
      %s69 = sphi 0, %s68
      %s85 = sphi 0, %s69
      %s93 = sphi 0, %s95
      %s96 = sphi 0, %s93
      %s97 = sphi 0, %s96
      %s113 = sphi 0, %s97
    $region4: #{tpu_custom_call.1} parent=1 // loop_header_branch
      %20 = sbr.rel (%p18) target = $region8
    $region5: #{tpu_custom_call.1} parent=1 // loop_body
      %s22 = ssub.s32 %s17, 1
      %s23 = ssub.s32 %s17, 2
      %s30 = sadd.s32 1, %s25
      %p31 = scmp.ge.s32.totalorder %s30, 2
      %s32 = scalar_select %p31, 0, %s30
      %s33 = sadd.s32 1, %s24
      %s34 = scalar_select %p31, %s33, %s24
      %p35 = scmp.ge.s32.totalorder %s34, 2
      %s36 = scalar_select %p35, 0, %s34
      %s37 = ssub.s32 %s25, %s32
      %p38 = scmp.eq.s32.totalorder %s37, 0
      %s40 = sadd.s32 %s39, 1
      %s41 = scalar_select %p38, %s39, %s40
      %p44 = pneg %p38
      %p45 = scmp.eq.s32.totalorder %s17, 3
      %p46 = por %p44, %p45
      %p47 = scmp.ne.s32.totalorder %s39, %s42
      %p48 = scmp.eq.s32.totalorder %s17, 0
      %p49 = por %p47, %p48
      %p50 = scmp.ne.s32.totalorder %s39, %s42
      %p51 = scmp.eq.s32.totalorder %s22, 3
      %p52 = por %p50, %p51
      %p53 = scmp.ne.s32.totalorder %s42, %s43
      %p54 = scmp.eq.s32.totalorder %s22, 0
      %p55 = por %p53, %p54
      %p56 = scmp.ne.s32.totalorder %s42, %s43
      %p57 = scmp.eq.s32.totalorder %s23, 3
      %p58 = por %p56, %p57
      %p60 = scmp.ne.s32.totalorder %s43, %s59
      %p61 = scmp.eq.s32.totalorder %s23, 0
      %p62 = por %p60, %p61
      %s63 = ssub.s32 %s24, %s36
      %p64 = scmp.eq.s32.totalorder %s63, 0
      %s66 = sadd.s32 %s65, 1
      %s67 = scalar_select %p64, %s65, %s66
      %p70 = pneg %p64
      %p71 = scmp.eq.s32.totalorder %s17, 3
      %p72 = por %p70, %p71
      %p73 = scmp.ne.s32.totalorder %s65, %s68
      %p74 = scmp.eq.s32.totalorder %s17, 0
      %p75 = por %p73, %p74
      %p76 = scmp.ne.s32.totalorder %s65, %s68
      %p77 = scmp.eq.s32.totalorder %s22, 3
      %p78 = por %p76, %p77
      %p79 = scmp.ne.s32.totalorder %s68, %s69
      %p80 = scmp.eq.s32.totalorder %s22, 0
      %p81 = por %p79, %p80
      %p82 = scmp.ne.s32.totalorder %s68, %s69
      %p83 = scmp.eq.s32.totalorder %s23, 3
      %p84 = por %p82, %p83
      %p86 = scmp.ne.s32.totalorder %s69, %s85
      %p87 = scmp.eq.s32.totalorder %s23, 0
      %p88 = por %p86, %p87
      %s89 = ssub.s32 %s24, %s36
      %s90 = ssub.s32 %s25, %s32
      %s91 = sor.u32 %s89, %s90
      %p92 = scmp.eq.s32.totalorder %s91, 0
      %s94 = sadd.s32 %s93, 1
      %s95 = scalar_select %p92, %s93, %s94
      %p98 = pneg %p92
      %p99 = scmp.eq.s32.totalorder %s17, 3
      %p100 = por %p98, %p99
      %p101 = scmp.ne.s32.totalorder %s93, %s96
      %p102 = scmp.eq.s32.totalorder %s17, 0
      %p103 = por %p101, %p102
      %p104 = scmp.ne.s32.totalorder %s93, %s96
      %p105 = scmp.eq.s32.totalorder %s22, 3
      %p106 = por %p104, %p105
      %p107 = scmp.ne.s32.totalorder %s96, %s97
      %p108 = scmp.eq.s32.totalorder %s22, 0
      %p109 = por %p107, %p108
      %p110 = scmp.ne.s32.totalorder %s96, %s97
      %p111 = scmp.eq.s32.totalorder %s23, 3
      %p112 = por %p110, %p111
      %p114 = scmp.ne.s32.totalorder %s97, %s113
      %p115 = scmp.eq.s32.totalorder %s23, 0
      %p116 = por %p114, %p115
      %p117 = scmp.le.s32.totalorder 1, %s17
      %p118 = scmp.lt.s32.totalorder %s17, 5
      %p119 = pnand %p117, %p118
      %p120 = pneg %p119
      // Predicated region
      $region9: #{tpu_custom_call.1} parent=5 // pred_check
        _
      $region10: #{tpu_custom_call.1} parent=5 // pred_check_branch
        %122 = sbr.rel (%p119) target = $region12
      $region11: #{tpu_custom_call.1} parent=5 // pred_region
        %s123 = ssub.s32 %s17, 1
      $region12: #{tpu_custom_call.1} parent=5 // pred_fallthru
        _
      %p124 = scmp.lt.s32.totalorder %s17, 4
      // Predicated region
      $region13: #{tpu_custom_call.1} parent=5 // pred_check
        %p125 = pneg %p124
      $region14: #{tpu_custom_call.1} parent=5 // pred_check_branch
        %127 = sbr.rel (%p125) target = $region16
      $region15: #{tpu_custom_call.1} parent=5 // pred_region
        // Predicated region
        $region17: #{tpu_custom_call.1} parent=15 // pred_check
          %p128 = pneg %p49
        $region18: #{tpu_custom_call.1} parent=15 // pred_check_branch
          %130 = sbr.rel (%p128) target = $region20
        $region19: #{tpu_custom_call.1} parent=15 // pred_region
          %s131 = sand.u32 %s39, 1
          %s132 = scalar_lea.sflag [#allocation3], %s131
          %s133 = sand.u32 %s39, 1
          %s134 = smul.addr %s133, 64
          %s135 = scalar_lea.vmem [#allocation2], %s134
          %s136 = smul.u32 16, %s25
          %s138 = ssub.s32 1024, 1024
          %139 = vsyncadd %s132, %s138
          %s140 = smul.addr %s136, 64
          %s141 = scalar_lea.hbm %s0, %s140
          %s142 = sshll.u32 %s135, 4
          %s143 = int_to_ptr.vmem [resolvable:$true] %s142
          %148 = dma.hbm_to_vmem [thread:$0]  %s141, 1024, %s143, %s132, 64, 64, 4
        $region20: #{tpu_custom_call.1} parent=15 // pred_fallthru
          _
        // Predicated region
        $region21: #{tpu_custom_call.1} parent=15 // pred_check
          %p149 = pneg %p75
        $region22: #{tpu_custom_call.1} parent=15 // pred_check_branch
          %151 = sbr.rel (%p149) target = $region24
        $region23: #{tpu_custom_call.1} parent=15 // pred_region
          %s152 = sand.u32 %s65, 1
          %s153 = scalar_lea.sflag [#allocation6], %s152
          %s154 = sand.u32 %s65, 1
          %s155 = smul.addr %s154, 64
          %s156 = scalar_lea.vmem [#allocation5], %s155
          %s158 = ssub.s32 1024, 1024
          %159 = vsyncadd %s153, %s158
          %s160 = smul.addr %s24, 16
          %s161 = smul.addr %s160, 64
          %s162 = scalar_lea.hbm %s1, %s161
          %s163 = sshll.u32 %s156, 4
          %s164 = int_to_ptr.vmem [resolvable:$true] %s163
          %169 = dma.hbm_to_vmem [thread:$0]  %s162, 1024, %s164, %s153, 64, 64, 4
        $region24: #{tpu_custom_call.1} parent=15 // pred_fallthru
          _
      $region16: #{tpu_custom_call.1} parent=5 // pred_fallthru
        _
      %p170 = scmp.le.s32.totalorder 1, %s17
      %p171 = scmp.lt.s32.totalorder %s17, 5
      %p172 = pnand %p170, %p171
      %p173 = pneg %p172
      // Predicated region
      $region25: #{tpu_custom_call.1} parent=5 // pred_check
        _
      $region26: #{tpu_custom_call.1} parent=5 // pred_check_branch
        %175 = sbr.rel (%p172) target = $region28
      $region27: #{tpu_custom_call.1} parent=5 // pred_region
        %s176 = ssub.s32 %s17, 1
        %s177 = sand.u32 %s42, 1
        %s178 = scalar_lea.sflag [#allocation3], %s177
        %s179 = sand.u32 %s42, 1
        %s180 = smul.addr %s179, 64
        %s181 = scalar_lea.vmem [#allocation2], %s180
        // Predicated region
        $region29: #{tpu_custom_call.1} parent=27 // pred_check
          %p182 = pneg %p55
        $region30: #{tpu_custom_call.1} parent=27 // pred_check_branch
          %184 = sbr.rel (%p182) target = $region32
        $region31: #{tpu_custom_call.1} parent=27 // pred_region
          %185 = dma.done %s178, 1024
        $region32: #{tpu_custom_call.1} parent=27 // pred_fallthru
          _
        %s186 = sand.u32 %s68, 1
        %s187 = scalar_lea.sflag [#allocation6], %s186
        %s188 = sand.u32 %s68, 1
        %s189 = smul.addr %s188, 64
        %s190 = scalar_lea.vmem [#allocation5], %s189
        // Predicated region
        $region33: #{tpu_custom_call.1} parent=27 // pred_check
          %p191 = pneg %p81
        $region34: #{tpu_custom_call.1} parent=27 // pred_check_branch
          %193 = sbr.rel (%p191) target = $region36
        $region35: #{tpu_custom_call.1} parent=27 // pred_region
          %194 = dma.done %s187, 1024
        $region36: #{tpu_custom_call.1} parent=27 // pred_fallthru
          _
        %s195 = sand.u32 %s42, 1
        %s196 = scalar_lea.sflag [#allocation3], %s195
        %s197 = sand.u32 %s42, 1
        %s198 = smul.addr %s197, 64
        %s199 = scalar_lea.vmem [#allocation2], %s198
        %p200 = pneg %p55
        %p201 = pneg %p52
        %s202 = sand.u32 %s68, 1
        %s203 = scalar_lea.sflag [#allocation6], %s202
        %s204 = sand.u32 %s68, 1
        %s205 = smul.addr %s204, 64
        %s206 = scalar_lea.vmem [#allocation5], %s205
        %p207 = pneg %p81
        %p208 = pneg %p78
        %p209 = pneg %p109
        %p210 = pneg %p106
        %s211 = sand.u32 %s96, 1
        %s212 = scalar_lea.sflag [#allocation4], %s211
        %s213 = sand.u32 %s96, 1
        %s214 = smul.addr %s213, 64
        %s215 = scalar_lea.vmem [#allocation7], %s214
        %s216 = smul.u32 16, %s27
        %s217 = smul.u32 16, %s27
        %v219 = vld [vmem:[%s181] sm:$0xf]
        %v220 = vld [vmem:[%s181 + $0x4] sm:$0xf]
        %v221 = vld [vmem:[%s181 + $0x8] sm:$0xf]
        %v222 = vld [vmem:[%s181 + $0xc] sm:$0xf]
        %v223 = vld [vmem:[%s181 + $0x10] sm:$0xf]
        %v224 = vld [vmem:[%s181 + $0x14] sm:$0xf]
        %v225 = vld [vmem:[%s181 + $0x18] sm:$0xf]
        %v226 = vld [vmem:[%s181 + $0x1c] sm:$0xf]
        %v227 = vld [vmem:[%s181 + $0x20] sm:$0xf]
        %v228 = vld [vmem:[%s181 + $0x24] sm:$0xf]
        %v229 = vld [vmem:[%s181 + $0x28] sm:$0xf]
        %v230 = vld [vmem:[%s181 + $0x2c] sm:$0xf]
        %v231 = vld [vmem:[%s181 + $0x30] sm:$0xf]
        %v232 = vld [vmem:[%s181 + $0x34] sm:$0xf]
        %v233 = vld [vmem:[%s181 + $0x38] sm:$0xf]
        %v234 = vld [vmem:[%s181 + $0x3c] sm:$0xf]
        %v235 = vld [vmem:[%s190] sm:$0xf]
        %v236 = vld [vmem:[%s190 + $0x4] sm:$0xf]
        %v237 = vld [vmem:[%s190 + $0x8] sm:$0xf]
        %v238 = vld [vmem:[%s190 + $0xc] sm:$0xf]
        %v239 = vld [vmem:[%s190 + $0x10] sm:$0xf]
        %v240 = vld [vmem:[%s190 + $0x14] sm:$0xf]
        %v241 = vld [vmem:[%s190 + $0x18] sm:$0xf]
        %v242 = vld [vmem:[%s190 + $0x1c] sm:$0xf]
        %v243 = vld [vmem:[%s190 + $0x20] sm:$0xf]
        %v244 = vld [vmem:[%s190 + $0x24] sm:$0xf]
        %v245 = vld [vmem:[%s190 + $0x28] sm:$0xf]
        %v246 = vld [vmem:[%s190 + $0x2c] sm:$0xf]
        %v247 = vld [vmem:[%s190 + $0x30] sm:$0xf]
        %v248 = vld [vmem:[%s190 + $0x34] sm:$0xf]
        %v249 = vld [vmem:[%s190 + $0x38] sm:$0xf]
        %v250 = vld [vmem:[%s190 + $0x3c] sm:$0xf]
        %v267 = vunpack.c.l.b16 %v219
        %v268 = vunpack.c.l.b16 %v220
        %v269 = vunpack.c.l.b16 %v221
        %v270 = vunpack.c.l.b16 %v222
        %v271 = vunpack.c.l.b16 %v223
        %v272 = vunpack.c.l.b16 %v224
        %v273 = vunpack.c.l.b16 %v225
        %v274 = vunpack.c.l.b16 %v226
        %v275 = vunpack.c.l.b16 %v227
        %v276 = vunpack.c.l.b16 %v228
        %v277 = vunpack.c.l.b16 %v229
        %v278 = vunpack.c.l.b16 %v230
        %v279 = vunpack.c.l.b16 %v231
        %v280 = vunpack.c.l.b16 %v232
        %v281 = vunpack.c.l.b16 %v233
        %v282 = vunpack.c.l.b16 %v234
        %v283 = vpack.c.b16 %v268, %v267
        %v284 = vpack.c.b16 %v270, %v269
        %v285 = vpack.c.b16 %v272, %v271
        %v286 = vpack.c.b16 %v274, %v273
        %v287 = vpack.c.b16 %v276, %v275
        %v288 = vpack.c.b16 %v278, %v277
        %v289 = vpack.c.b16 %v280, %v279
        %v290 = vpack.c.b16 %v282, %v281
        %v315 = vunpack.c.l.b16 %v235
        %v316 = vunpack.c.l.b16 %v236
        %v317 = vunpack.c.l.b16 %v237
        %v318 = vunpack.c.l.b16 %v238
        %v319 = vunpack.c.l.b16 %v239
        %v320 = vunpack.c.l.b16 %v240
        %v321 = vunpack.c.l.b16 %v241
        %v322 = vunpack.c.l.b16 %v242
        %v323 = vunpack.c.l.b16 %v243
        %v324 = vunpack.c.l.b16 %v244
        %v325 = vunpack.c.l.b16 %v245
        %v326 = vunpack.c.l.b16 %v246
        %v327 = vunpack.c.l.b16 %v247
        %v328 = vunpack.c.l.b16 %v248
        %v329 = vunpack.c.l.b16 %v249
        %v330 = vunpack.c.l.b16 %v250
        %v331 = vpack.c.b16 %v316, %v315
        %v332 = vpack.c.b16 %v318, %v317
        %v333 = vpack.c.b16 %v320, %v319
        %v334 = vpack.c.b16 %v322, %v321
        %v335 = vpack.c.b16 %v324, %v323
        %v336 = vpack.c.b16 %v326, %v325
        %v337 = vpack.c.b16 %v328, %v327
        %v338 = vpack.c.b16 %v330, %v329
        %347 = vmatprep.subr.bf16.mxu0 0
        %348 = vmatpush1.bf16.msra.mxu0 %v331
        %349 = vmatprep.subr.bf16.mxu0 0
        %350 = vmatpush1.bf16.msra.mxu0 %v332
        %351 = vmatprep.subr.bf16.mxu0 0
        %352 = vmatpush1.bf16.msra.mxu0 %v333
        %353 = vmatprep.subr.bf16.mxu0 0
        %354 = vmatpush1.bf16.msra.mxu0 %v334
        %355 = vmatprep.subr.bf16.mxu0 0
        %356 = vmatpush1.bf16.msra.mxu0 %v335
        %357 = vmatprep.subr.bf16.mxu0 0
        %358 = vmatpush1.bf16.msra.mxu0 %v336
        %359 = vmatprep.subr.bf16.mxu0 0
        %360 = vmatpush1.bf16.msra.mxu0 %v337
        %361 = vmatprep.subr.bf16.mxu0 0
        %362 = vmatpush1.bf16.msra.mxu0 %v338
        %363 = vmatprep.subr.bf16.mxu0 0
        %364 = vmatpush1.bf16.msra.mxu0 0
        %365 = vmatprep.subr.bf16.mxu0 0
        %366 = vmatpush1.bf16.msra.mxu0 0
        %367 = vmatprep.subr.bf16.mxu0 0
        %368 = vmatpush1.bf16.msra.mxu0 0
        %369 = vmatprep.subr.bf16.mxu0 0
        %370 = vmatpush1.bf16.msra.mxu0 0
        %371 = vmatprep.subr.bf16.mxu0 0
        %372 = vmatpush1.bf16.msra.mxu0 0
        %373 = vmatprep.subr.bf16.mxu0 0
        %374 = vmatpush1.bf16.msra.mxu0 0
        %375 = vmatprep.subr.bf16.mxu0 0
        %376 = vmatpush1.bf16.msra.mxu0 0
        %377 = vmatprep.subr.bf16.mxu0 0
        %378 = vmatpush1.bf16.msra.mxu0 0
        %379 = vmatprep.mubr.bf16.mxu0 0
        %380 = vmatmul.mubr.bf16.gmra.mrb[0].mxu0 %v283
        %v381 = vpop.f32.mrb[0].mxu0
        %v382 = vadd.f32 0.0, %v381
        %v383 = vpop.f32.mrb[0].mxu0
        %v384 = vpop.f32.mrb[0].mxu0
        %v385 = vadd.f32 0.0, %v384
        %v386 = vpop.f32.mrb[0].mxu0
        %387 = vmatprep.mubr.bf16.mxu0 0
        %388 = vmatmul.mubr.bf16.gmra.mrb[0].mxu0 %v284
        %v389 = vpop.f32.mrb[0].mxu0
        %v390 = vadd.f32 0.0, %v389
        %v391 = vpop.f32.mrb[0].mxu0
        %v392 = vpop.f32.mrb[0].mxu0
        %v393 = vadd.f32 0.0, %v392
        %v394 = vpop.f32.mrb[0].mxu0
        %395 = vmatprep.mubr.bf16.mxu0 0
        %396 = vmatmul.mubr.bf16.gmra.mrb[0].mxu0 %v285
        %v397 = vpop.f32.mrb[0].mxu0
        %v398 = vadd.f32 0.0, %v397
        %v399 = vpop.f32.mrb[0].mxu0
        %v400 = vpop.f32.mrb[0].mxu0
        %v401 = vadd.f32 0.0, %v400
        %v402 = vpop.f32.mrb[0].mxu0
        %403 = vmatprep.mubr.bf16.mxu0 0
        %404 = vmatmul.mubr.bf16.gmra.mrb[0].mxu0 %v286
        %v405 = vpop.f32.mrb[0].mxu0
        %v406 = vadd.f32 0.0, %v405
        %v407 = vpop.f32.mrb[0].mxu0
        %v408 = vpop.f32.mrb[0].mxu0
        %v409 = vadd.f32 0.0, %v408
        %v410 = vpop.f32.mrb[0].mxu0
        %411 = vmatprep.mubr.bf16.mxu0 0
        %412 = vmatmul.mubr.bf16.gmra.mrb[0].mxu0 %v287
        %v413 = vpop.f32.mrb[0].mxu0
        %v414 = vadd.f32 0.0, %v413
        %v415 = vpop.f32.mrb[0].mxu0
        %v416 = vpop.f32.mrb[0].mxu0
        %v417 = vadd.f32 0.0, %v416
        %v418 = vpop.f32.mrb[0].mxu0
        %419 = vmatprep.mubr.bf16.mxu0 0
        %420 = vmatmul.mubr.bf16.gmra.mrb[0].mxu0 %v288
        %v421 = vpop.f32.mrb[0].mxu0
        %v422 = vadd.f32 0.0, %v421
        %v423 = vpop.f32.mrb[0].mxu0
        %v424 = vpop.f32.mrb[0].mxu0
        %v425 = vadd.f32 0.0, %v424
        %v426 = vpop.f32.mrb[0].mxu0
        %427 = vmatprep.mubr.bf16.mxu0 0
        %428 = vmatmul.mubr.bf16.gmra.mrb[0].mxu0 %v289
        %v429 = vpop.f32.mrb[0].mxu0
        %v430 = vadd.f32 0.0, %v429
        %v431 = vpop.f32.mrb[0].mxu0
        %v432 = vpop.f32.mrb[0].mxu0
        %v433 = vadd.f32 0.0, %v432
        %v434 = vpop.f32.mrb[0].mxu0
        %435 = vmatprep.mubr.bf16.mxu0 0
        %436 = vmatmul.mubr.bf16.gmra.mrb[0].mxu0 %v290
        %v437 = vpop.f32.mrb[0].mxu0
        %v438 = vadd.f32 0.0, %v437
        %v439 = vpop.f32.mrb[0].mxu0
        %v440 = vpop.f32.mrb[0].mxu0
        %v441 = vadd.f32 0.0, %v440
        %v442 = vpop.f32.mrb[0].mxu0
        %443 = vdwg.mxu0
        %v444 = vpack.c.bf16 %v385, %v382
        %v445 = vpack.c.bf16 %v393, %v390
        %v446 = vpack.c.bf16 %v401, %v398
        %v447 = vpack.c.bf16 %v409, %v406
        %v448 = vpack.c.bf16 %v417, %v414
        %v449 = vpack.c.bf16 %v425, %v422
        %v450 = vpack.c.bf16 %v433, %v430
        %v451 = vpack.c.bf16 %v441, %v438
        %v460 = vunpack.c.l.b16 %v444
        %v461 = vunpack.c.h.b16 %v444
        %v462 = vunpack.c.l.b16 %v445
        %v463 = vunpack.c.h.b16 %v445
        %v464 = vunpack.c.l.b16 %v446
        %v465 = vunpack.c.h.b16 %v446
        %v466 = vunpack.c.l.b16 %v447
        %v467 = vunpack.c.h.b16 %v447
        %v468 = vunpack.c.l.b16 %v448
        %v469 = vunpack.c.h.b16 %v448
        %v470 = vunpack.c.l.b16 %v449
        %v471 = vunpack.c.h.b16 %v449
        %v472 = vunpack.c.l.b16 %v450
        %v473 = vunpack.c.h.b16 %v450
        %v474 = vunpack.c.l.b16 %v451
        %v475 = vunpack.c.h.b16 %v451
        %v476 = vpack.c.b16 %v460, %v460
        %v477 = vpack.c.b16 %v461, %v461
        %v478 = vpack.c.b16 %v462, %v462
        %v479 = vpack.c.b16 %v463, %v463
        %v480 = vpack.c.b16 %v464, %v464
        %v481 = vpack.c.b16 %v465, %v465
        %v482 = vpack.c.b16 %v466, %v466
        %v483 = vpack.c.b16 %v467, %v467
        %v484 = vpack.c.b16 %v468, %v468
        %v485 = vpack.c.b16 %v469, %v469
        %v486 = vpack.c.b16 %v470, %v470
        %v487 = vpack.c.b16 %v471, %v471
        %v488 = vpack.c.b16 %v472, %v472
        %v489 = vpack.c.b16 %v473, %v473
        %v490 = vpack.c.b16 %v474, %v474
        %v491 = vpack.c.b16 %v475, %v475
        %508 = vst [vmem:[%s215] sm:$0xf] %v476
        %509 = vst [vmem:[%s215 + $0x4] sm:$0xf] %v477
        %510 = vst [vmem:[%s215 + $0x8] sm:$0xf] %v478
        %511 = vst [vmem:[%s215 + $0xc] sm:$0xf] %v479
        %512 = vst [vmem:[%s215 + $0x10] sm:$0xf] %v480
        %513 = vst [vmem:[%s215 + $0x14] sm:$0xf] %v481
        %514 = vst [vmem:[%s215 + $0x18] sm:$0xf] %v482
        %515 = vst [vmem:[%s215 + $0x1c] sm:$0xf] %v483
        %516 = vst [vmem:[%s215 + $0x20] sm:$0xf] %v484
        %517 = vst [vmem:[%s215 + $0x24] sm:$0xf] %v485
        %518 = vst [vmem:[%s215 + $0x28] sm:$0xf] %v486
        %519 = vst [vmem:[%s215 + $0x2c] sm:$0xf] %v487
        %520 = vst [vmem:[%s215 + $0x30] sm:$0xf] %v488
        %521 = vst [vmem:[%s215 + $0x34] sm:$0xf] %v489
        %522 = vst [vmem:[%s215 + $0x38] sm:$0xf] %v490
        %523 = vst [vmem:[%s215 + $0x3c] sm:$0xf] %v491
        %s524 = sand.u32 %s96, 1
        %s525 = scalar_lea.sflag [#allocation4], %s524
        %s526 = sand.u32 %s96, 1
        %s527 = smul.addr %s526, 64
        %s528 = scalar_lea.vmem [#allocation7], %s527
        // Predicated region
        $region37: #{tpu_custom_call.1} parent=27 // pred_check
          %p529 = pneg %p106
        $region38: #{tpu_custom_call.1} parent=27 // pred_check_branch
          %531 = sbr.rel (%p529) target = $region40
        $region39: #{tpu_custom_call.1} parent=27 // pred_region
          %s532 = smul.u32 16, %s27
          %s534 = ssub.s32 1024, 1024
          %535 = vsyncadd %s525, %s534
          %s536 = smul.addr %s26, 32
          %s537 = sadd.s32 %s532, %s536
          %s538 = smul.addr %s537, 64
          %s539 = scalar_lea.hbm %s2, %s538
          %s540 = sshll.u32 %s528, 4
          %s541 = int_to_ptr.vmem [resolvable:$true] %s540
          %546 = dma.vmem_to_hbm [thread:$0]  %s541, 1024, %s539, %s525, 64, 64, 4
        $region40: #{tpu_custom_call.1} parent=27 // pred_fallthru
          _
      $region28: #{tpu_custom_call.1} parent=5 // pred_fallthru
        _
      %p547 = scmp.le.s32.totalorder 2, %s17
      // Predicated region
      $region41: #{tpu_custom_call.1} parent=5 // pred_check
        %p548 = pneg %p547
      $region42: #{tpu_custom_call.1} parent=5 // pred_check_branch
        %550 = sbr.rel (%p548) target = $region44
      $region43: #{tpu_custom_call.1} parent=5 // pred_region
        %s551 = ssub.s32 %s17, 2
        // Predicated region
        $region45: #{tpu_custom_call.1} parent=43 // pred_check
          %p552 = pneg %p112
        $region46: #{tpu_custom_call.1} parent=43 // pred_check_branch
          %554 = sbr.rel (%p552) target = $region48
        $region47: #{tpu_custom_call.1} parent=43 // pred_region
          %s555 = sand.u32 %s97, 1
          %s556 = scalar_lea.sflag [#allocation4], %s555
          %s557 = sand.u32 %s97, 1
          %s558 = smul.addr %s557, 64
          %s559 = scalar_lea.vmem [#allocation7], %s558
          %560 = dma.done %s556, 1024
        $region48: #{tpu_custom_call.1} parent=43 // pred_fallthru
          _
      $region44: #{tpu_custom_call.1} parent=5 // pred_fallthru
        _
    $region6: #{tpu_custom_call.1} parent=1 // loop_footer
      %s21 = sadd.s32 1, %s17
    $region7: #{tpu_custom_call.1} parent=1 // loop_footer_branch
      %16 = sbr.rel target = $region3
    $region8: #{tpu_custom_call.1} parent=1 // loop_exit
      _
    %561 = vsyncpa [#allocation3], 1
    %s562 = scalar_lea.sflag [#allocation3], 1
    %563 = vsyncpa %s562, 1
    %564 = vsyncpa [#allocation6], 1
    %s565 = scalar_lea.sflag [#allocation6], 1
    %566 = vsyncpa %s565, 1
    %567 = vsyncpa [#allocation4], 1
    %s568 = scalar_lea.sflag [#allocation4], 1
    %569 = vsyncpa %s568, 1

</llo_original>
